<compile_context>
chip_gen: v5e
topology: v5e:2x2
jax: 0.10.0
libtpu: 0.0.40
codegen_flags: <defaults>
</compile_context>

<pallas_src>
import functools
import math

import jax
import jax.numpy as jnp
from jax.experimental import pallas as pl
from jax.experimental.pallas import tpu as pltpu


_SMALL_BYTES = 64 * 1024        # below this, fused XLA cat+tanh beats any pallas_call
_MAX_BLOCK_BYTES = 2 << 20      # per-block cap -> <= ~12 MiB pipelined VMEM footprint


def _rowblock_kernel(cl, x_ref, o_ref):
    """Path A: one grid step = rt full rows.  out row = [tanh(row) | tanh(row)]."""
    t = jnp.tanh(x_ref[...])
    if t.dtype != o_ref.dtype:          # static (trace-time) decision
        t = t.astype(o_ref.dtype)
    # tanh computed once; two lane-dense, 128-aligned slab stores (cl % 128 == 0).
    o_ref[:, :cl] = t
    o_ref[:, cl:] = t


def _copyaxis_kernel(x_ref, o_ref, t_ref):
    """Path B: grid = (row blocks, lane tiles, 2 copies); copy axis innermost.

    The input block index does not depend on the copy axis, so Pallas skips the
    input re-fetch on c == 1; tanh is computed once per tile (cached in VMEM
    scratch) and stored to the two output slabs.
    """
    c = pl.program_id(2)

    @pl.when(c == 0)
    def _():
        t_ref[...] = jnp.tanh(x_ref[...]).astype(t_ref.dtype)

    o_ref[...] = t_ref[...]


def _pick_div(n, candidates):
    for c in candidates:
        if c <= n and n % c == 0:
            return c
    return None


def _choose_rt(b, row_bytes, max_block_bytes=_MAX_BLOCK_BYTES):
    """Largest row tile (multiple of 8, dividing b) under the per-block byte cap.

    Prefers b // rt >= 2 so both v7x TensorCores get work on the parallel row
    axis.  Falls back to rt == b (block == full dim is always legal) for small
    or awkward batch sizes; returns None if even that exceeds the cap.
    """
    max_rt = max_block_bytes // max(row_bytes, 1)
    if max_rt < 1:
        return None
    for want_two_blocks in (True, False):
        for rt in (256, 128, 64, 32, 16, 8):
            if rt <= max_rt and b % rt == 0 and (not want_two_blocks or b // rt >= 2):
                return rt
    if b <= max_rt:
        return b
    return None


def cat_view_tanh(x, *, _force_path=None):
    """Equivalent of: y = torch.cat([x, x], dim=1); return y.view(B, -1).tanh()."""
    b = x.shape[0]
    cl = math.prod(x.shape[1:])
    itemsize = x.dtype.itemsize
    x2 = x.reshape(b, cl)               # lane-dense: long contiguous last dim

    def _xla_fallback():
        return jnp.tanh(jnp.concatenate([x2, x2], axis=-1))

    if _force_path is None and b * cl * itemsize <= _SMALL_BYTES:
        # Tiny inputs (e.g. the module's (2, 3, 4)): pure launch/DMA overhead
        # territory — let XLA fuse cat+tanh.
        return _xla_fallback()

    if cl % 128 != 0:
        # TODO(synk): pad / edge-mask a ragged lane dim instead of the XLA fallback.
        return _xla_fallback()

    out_shape = jax.ShapeDtypeStruct((b, 2 * cl), x.dtype)

    # ---- Path A: full (rt, 2*cl) output row blocks --------------------------
    rt_rows = _choose_rt(b, cl * itemsize)
    if _force_path != "copy" and rt_rows is not None:
        return pl.pallas_call(
            functools.partial(_rowblock_kernel, cl),
            out_shape=out_shape,
            grid=(b // rt_rows,),
            in_specs=[pl.BlockSpec((rt_rows, cl), lambda i: (i, 0))],
            out_specs=pl.BlockSpec((rt_rows, 2 * cl), lambda i: (i, 0)),
            compiler_params=pltpu.CompilerParams(
                dimension_semantics=("parallel",)),
        )(x2)

    # ---- Path B: cl too large for a full row block -> size-2 copy grid axis --
    ft = _pick_div(cl, (2048, 1024, 512, 256, 128))
    rt = _choose_rt(b, ft * itemsize) if ft is not None else None
    if rt is None:
        # TODO(synk): no row tiling fits the VMEM budget for this batch size.
        return _xla_fallback()
    n_lane_tiles = cl // ft
    return pl.pallas_call(
        _copyaxis_kernel,
        out_shape=out_shape,
        grid=(b // rt, n_lane_tiles, 2),
        in_specs=[pl.BlockSpec((rt, ft), lambda i, j, c: (i, j))],
        out_specs=pl.BlockSpec((rt, ft),
                               lambda i, j, c: (i, c * n_lane_tiles + j)),
        scratch_shapes=[pltpu.VMEM((rt, ft), x.dtype)],
        compiler_params=pltpu.CompilerParams(
            dimension_semantics=("parallel", "parallel", "arbitrary")),
    )(x2)


def _reference(x):
    b = x.shape[0]
    return jnp.tanh(jnp.concatenate([x, x], axis=1).reshape(b, -1))


if __name__ == "__main__":
    key = jax.random.PRNGKey(0)
    k0, k1, k2, k3 = jax.random.split(key, 4)

    # 1) Module-sized input (2, 3, 4): tiny -> fused-XLA bypass path.
    x_small = jax.random.normal(k0, (2, 3, 4), dtype=jnp.float32)
    out_small = cat_view_tanh(x_small)
    jax.block_until_ready(out_small)
    assert out_small.shape == (2, 24), out_small.shape
    assert jnp.allclose(out_small, _reference(x_small), atol=1e-6), "small mismatch"

    # 2) Path A kernel (full-row output blocks, parallel row grid).
    x_rows = jax.random.normal(k1, (16, 16, 128), dtype=jnp.float32)   # cl = 2048
    out_rows = cat_view_tanh(x_rows)
    jax.block_until_ready(out_rows)
    assert out_rows.shape == (16, 2 * 16 * 128), out_rows.shape
    assert jnp.allclose(out_rows, _reference(x_rows), atol=1e-6), "rows mismatch"

    # 3) Path A kernel with rt == b (batch not a multiple of 8).
    x_small_b = jax.random.normal(k2, (4, 48, 128), dtype=jnp.float32)  # cl = 6144
    out_small_b = cat_view_tanh(x_small_b)
    jax.block_until_ready(out_small_b)
    assert out_small_b.shape == (4, 2 * 48 * 128), out_small_b.shape
    assert jnp.allclose(out_small_b, _reference(x_small_b), atol=1e-6), "rt==b mismatch"

    # 4) Path B kernel (size-2 copy grid axis), forced to exercise the code path.
    x_copy = jax.random.normal(k3, (16, 8, 256), dtype=jnp.float32)     # cl = 2048
    out_copy = cat_view_tanh(x_copy, _force_path="copy")
    jax.block_until_ready(out_copy)
    assert out_copy.shape == (16, 2 * 8 * 256), out_copy.shape
    assert jnp.allclose(out_copy, _reference(x_copy), atol=1e-6), "copy-axis mismatch"

    print("KERNEL_OK")
</pallas_src>

<mosaic_0001>
module attributes {stable_mosaic.version = 11 : i64} {
  func.func @_rowblock_kernel(%arg0: i32, %arg1: memref<8x2048xf32, #tpu.memory_space<vmem>>, %arg2: memref<8x4096xf32, #tpu.memory_space<vmem>>) attributes {dimension_semantics = [#tpu.dimension_semantics<parallel>], iteration_bounds = array<i64: 2>, scalar_prefetch = 0 : i64, scratch_operands = 0 : i64, tpu.core_type = #tpu.core_type<tc>, window_params = [{transform_indices = @transform_0, window_bounds = array<i64: 8, 2048>}, {transform_indices = @transform_1, window_bounds = array<i64: 8, 4096>}]} {
    %c0 = arith.constant 0 : index
    %c0_0 = arith.constant 0 : index
    %0 = vector.load %arg1[%c0, %c0_0] : memref<8x2048xf32, #tpu.memory_space<vmem>>, vector<8x2048xf32>
    %1 = math.tanh %0 : vector<8x2048xf32>
    %c0_1 = arith.constant 0 : index
    %c0_2 = arith.constant 0 : index
    %2 = vector.load %arg2[%c0_1, %c0_2] : memref<8x4096xf32, #tpu.memory_space<vmem>>, vector<8x2048xf32>
    tpu.vector_store %arg2[%c0_1, %c0_2], %1 {strides = array<i32>} : memref<8x4096xf32, #tpu.memory_space<vmem>>, vector<8x2048xf32>,
    %c0_3 = arith.constant 0 : index
    %c2048 = arith.constant 2048 : index
    %3 = vector.load %arg2[%c0_3, %c2048] : memref<8x4096xf32, #tpu.memory_space<vmem>>, vector<8x2048xf32>
    tpu.vector_store %arg2[%c0_3, %c2048], %1 {strides = array<i32>} : memref<8x4096xf32, #tpu.memory_space<vmem>>, vector<8x2048xf32>,
    return
  }
  func.func @transform_0(%arg0: i32) -> (i32, i32) {
    %c0_i32 = arith.constant 0 : i32
    %c0_i32_0 = arith.constant 0 : i32
    return %arg0, %c0_i32 : i32, i32
  }
  func.func @transform_1(%arg0: i32) -> (i32, i32) {
    %c0_i32 = arith.constant 0 : i32
    %c0_i32_0 = arith.constant 0 : i32
    return %arg0, %c0_i32 : i32, i32
  }
}

</mosaic_0001>

<llo_original>
// kernel: tpu_custom_call.1
$region0: #{tpu_custom_call.1}
  #allocation0 [shape = 'u32[]', space=smem, size = 0x4, offset = 0x4, fixed_abs, tag = 'smem constant byte address 0x4 - core index']
  #allocation1 [shape = 'u32[72,128]{1,0:T(1,128)}', space=vmem, size = 0x9000, scoped, tag = 'internal scratch']
  %s0 = inlined_call_operand.hbm [shape: f32[16,2048], index: 0, kind: input, shape index: {}]
  %s1 = inlined_call_operand.hbm [shape: f32[16,4096], index: 1, kind: output, shape index: {}]
  %s2 = sld [smem:[#allocation0]]
  $region41: #{tpu_custom_call.1} parent=0
    _
  %s4 = ssub.s32 1, %s2
  %s5 = scalar_select 0, %s4, %s2
  $region1: #{tpu_custom_call.1} parent=0
    #allocation2 [shape = 'u8[131072]{0}', space=vmem, size = 0x20000, scoped, tag = 'input window, operand 0']
    #allocation3 [shape = 's32[2]{0}', space=sflag, size = 0x8, scoped, tag = 'scoped memory for tpu_custom_call.1']
    #allocation4 [shape = 's32[2]{0}', space=sflag, size = 0x8, scoped, tag = 'scoped memory for tpu_custom_call.1']
    #allocation5 [shape = 'u8[262144]{0}', space=vmem, size = 0x40000, scoped, tag = 'output window, operand 0']
    %6 = vsyncpa [#allocation3], 0
    %s7 = scalar_lea.sflag [#allocation3], 1
    %8 = vsyncpa %s7, 0
    %9 = vsyncpa [#allocation4], 0
    %s10 = scalar_lea.sflag [#allocation4], 1
    %11 = vsyncpa %s10, 0
    loop: start=0, step=1, limit=4
    $region2: #{tpu_custom_call.1} parent=1 // loop_pre_header
      _
    $region3: #{tpu_custom_call.1} parent=1 // loop_header
      %s13 = sphi 0, %s17
      %p14 = scmp.ge.s32.totalorder %s13, 4
      %s23 = sphi 0, %s25
      %s26 = sphi 0, %s23
      %s27 = sphi 0, %s26
      %s43 = sphi 0, %s27
      %s49 = sphi 0, %s51
      %s52 = sphi 0, %s49
      %s53 = sphi 0, %s52
      %s69 = sphi 0, %s53
    $region4: #{tpu_custom_call.1} parent=1 // loop_header_branch
      %16 = sbr.rel (%p14) target = $region8
    $region5: #{tpu_custom_call.1} parent=1 // loop_body
      %s18 = ssub.s32 %s13, 1
      %s19 = ssub.s32 %s13, 2
      %s20 = sadd.s32 %s13, 1
      %s21 = ssub.s32 %s13, %s20
      %p22 = scmp.eq.s32.totalorder %s21, 0
      %s24 = sadd.s32 %s23, 1
      %s25 = scalar_select %p22, %s23, %s24
      %p28 = pneg %p22
      %p29 = scmp.eq.s32.totalorder %s13, 1
      %p30 = por %p28, %p29
      %p31 = scmp.ne.s32.totalorder %s23, %s26
      %p32 = scmp.eq.s32.totalorder %s13, 0
      %p33 = por %p31, %p32
      %p34 = scmp.ne.s32.totalorder %s23, %s26
      %p35 = scmp.eq.s32.totalorder %s18, 1
      %p36 = por %p34, %p35
      %p37 = scmp.ne.s32.totalorder %s26, %s27
      %p38 = scmp.eq.s32.totalorder %s18, 0
      %p39 = por %p37, %p38
      %p40 = scmp.ne.s32.totalorder %s26, %s27
      %p41 = scmp.eq.s32.totalorder %s19, 1
      %p42 = por %p40, %p41
      %p44 = scmp.ne.s32.totalorder %s27, %s43
      %p45 = scmp.eq.s32.totalorder %s19, 0
      %p46 = por %p44, %p45
      %s47 = ssub.s32 %s13, %s20
      %p48 = scmp.eq.s32.totalorder %s47, 0
      %s50 = sadd.s32 %s49, 1
      %s51 = scalar_select %p48, %s49, %s50
      %p54 = pneg %p48
      %p55 = scmp.eq.s32.totalorder %s13, 1
      %p56 = por %p54, %p55
      %p57 = scmp.ne.s32.totalorder %s49, %s52
      %p58 = scmp.eq.s32.totalorder %s13, 0
      %p59 = por %p57, %p58
      %p60 = scmp.ne.s32.totalorder %s49, %s52
      %p61 = scmp.eq.s32.totalorder %s18, 1
      %p62 = por %p60, %p61
      %p63 = scmp.ne.s32.totalorder %s52, %s53
      %p64 = scmp.eq.s32.totalorder %s18, 0
      %p65 = por %p63, %p64
      %p66 = scmp.ne.s32.totalorder %s52, %s53
      %p67 = scmp.eq.s32.totalorder %s19, 1
      %p68 = por %p66, %p67
      %p70 = scmp.ne.s32.totalorder %s53, %s69
      %p71 = scmp.eq.s32.totalorder %s19, 0
      %p72 = por %p70, %p71
      %p73 = scmp.le.s32.totalorder 1, %s13
      %p74 = scmp.lt.s32.totalorder %s13, 3
      %p75 = pnand %p73, %p74
      %p76 = pneg %p75
      // Predicated region
      $region9: #{tpu_custom_call.1} parent=5 // pred_check
        _
      $region10: #{tpu_custom_call.1} parent=5 // pred_check_branch
        %78 = sbr.rel (%p75) target = $region12
      $region11: #{tpu_custom_call.1} parent=5 // pred_region
        %s79 = ssub.s32 %s13, 1
      $region12: #{tpu_custom_call.1} parent=5 // pred_fallthru
        _
      %p80 = scmp.lt.s32.totalorder %s13, 2
      // Predicated region
      $region13: #{tpu_custom_call.1} parent=5 // pred_check
        %p81 = pneg %p80
      $region14: #{tpu_custom_call.1} parent=5 // pred_check_branch
        %83 = sbr.rel (%p81) target = $region16
      $region15: #{tpu_custom_call.1} parent=5 // pred_region
        // Predicated region
        $region17: #{tpu_custom_call.1} parent=15 // pred_check
          %p84 = pneg %p33
        $region18: #{tpu_custom_call.1} parent=15 // pred_check_branch
          %86 = sbr.rel (%p84) target = $region20
        $region19: #{tpu_custom_call.1} parent=15 // pred_region
          %s87 = sand.u32 %s23, 1
          %s88 = scalar_lea.sflag [#allocation3], %s87
          %s89 = sand.u32 %s23, 1
          %s90 = smul.addr %s89, 128
          %s91 = scalar_lea.vmem [#allocation2], %s90
          %93 = vsyncadd %s88, 0
          %s94 = smul.addr %s13, 16
          %s95 = smul.addr %s94, 8
          %s96 = scalar_lea.hbm %s0, %s95
          %s98 = sshll.u32 %s96, 4
          %s99 = int_to_ptr.hbm [resolvable:$true] %s98
          %s100 = sshll.u32 %s91, 4
          %s101 = int_to_ptr.vmem [resolvable:$true] %s100
          %103 = dma.hbm_to_vmem [thread:$0]  %s99, 2048, %s101, %s88
        $region20: #{tpu_custom_call.1} parent=15 // pred_fallthru
          _
      $region16: #{tpu_custom_call.1} parent=5 // pred_fallthru
        _
      %p104 = scmp.le.s32.totalorder 1, %s13
      %p105 = scmp.lt.s32.totalorder %s13, 3
      %p106 = pnand %p104, %p105
      %p107 = pneg %p106
      // Predicated region
      $region21: #{tpu_custom_call.1} parent=5 // pred_check
        _
      $region22: #{tpu_custom_call.1} parent=5 // pred_check_branch
        %109 = sbr.rel (%p106) target = $region24
      $region23: #{tpu_custom_call.1} parent=5 // pred_region
        %s110 = ssub.s32 %s13, 1
        %s111 = sand.u32 %s26, 1
        %s112 = scalar_lea.sflag [#allocation3], %s111
        %s113 = sand.u32 %s26, 1
        %s114 = smul.addr %s113, 128
        %s115 = scalar_lea.vmem [#allocation2], %s114
        // Predicated region
        $region25: #{tpu_custom_call.1} parent=23 // pred_check
          %p116 = pneg %p39
        $region26: #{tpu_custom_call.1} parent=23 // pred_check_branch
          %118 = sbr.rel (%p116) target = $region28
        $region27: #{tpu_custom_call.1} parent=23 // pred_region
          %120 = dma.done %s112, 2048
        $region28: #{tpu_custom_call.1} parent=23 // pred_fallthru
          _
        %s121 = sand.u32 %s26, 1
        %s122 = scalar_lea.sflag [#allocation3], %s121
        %s123 = sand.u32 %s26, 1
        %s124 = smul.addr %s123, 128
        %s125 = scalar_lea.vmem [#allocation2], %s124
        %p126 = pneg %p39
        %p127 = pneg %p36
        %p128 = pneg %p65
        %p129 = pneg %p62
        %s130 = sand.u32 %s52, 1
        %s131 = scalar_lea.sflag [#allocation4], %s130
        %s132 = sand.u32 %s52, 1
        %s133 = smul.addr %s132, 256
        %s134 = scalar_lea.vmem [#allocation5], %s133
        %v135 = vld [vmem:[%s115] sm:$0xff]
        %v136 = vld [vmem:[%s115 + $0x8] sm:$0xff]
        %v137 = vld [vmem:[%s115 + $0x10] sm:$0xff]
        %v138 = vld [vmem:[%s115 + $0x18] sm:$0xff]
        %v139 = vld [vmem:[%s115 + $0x20] sm:$0xff]
        %v140 = vld [vmem:[%s115 + $0x28] sm:$0xff]
        %v141 = vld [vmem:[%s115 + $0x30] sm:$0xff]
        %v142 = vld [vmem:[%s115 + $0x38] sm:$0xff]
        %v143 = vld [vmem:[%s115 + $0x40] sm:$0xff]
        %v144 = vld [vmem:[%s115 + $0x48] sm:$0xff]
        %v145 = vld [vmem:[%s115 + $0x50] sm:$0xff]
        %v146 = vld [vmem:[%s115 + $0x58] sm:$0xff]
        %v147 = vld [vmem:[%s115 + $0x60] sm:$0xff]
        %v148 = vld [vmem:[%s115 + $0x68] sm:$0xff]
        %v149 = vld [vmem:[%s115 + $0x70] sm:$0xff]
        %v150 = vld [vmem:[%s115 + $0x78] sm:$0xff]
        %v151 = vtanh.pop %v135
        %v152 = vtanh.pop %v136
        %v153 = vtanh.pop %v137
        %v154 = vtanh.pop %v138
        %v155 = vtanh.pop %v139
        %v156 = vtanh.pop %v140
        %v157 = vtanh.pop %v141
        %v158 = vtanh.pop %v142
        %v159 = vtanh.pop %v143
        %v160 = vtanh.pop %v144
        %v161 = vtanh.pop %v145
        %v162 = vtanh.pop %v146
        %v163 = vtanh.pop %v147
        %v164 = vtanh.pop %v148
        %v165 = vtanh.pop %v149
        %v166 = vtanh.pop %v150
        %167 = vst [vmem:[%s134] sm:$0xff] %v151
        %168 = vst [vmem:[%s134 + $0x8] sm:$0xff] %v152
        %169 = vst [vmem:[%s134 + $0x10] sm:$0xff] %v153
        %170 = vst [vmem:[%s134 + $0x18] sm:$0xff] %v154
        %171 = vst [vmem:[%s134 + $0x20] sm:$0xff] %v155
        %172 = vst [vmem:[%s134 + $0x28] sm:$0xff] %v156
        %173 = vst [vmem:[%s134 + $0x30] sm:$0xff] %v157
        %174 = vst [vmem:[%s134 + $0x38] sm:$0xff] %v158
        %175 = vst [vmem:[%s134 + $0x40] sm:$0xff] %v159
        %176 = vst [vmem:[%s134 + $0x48] sm:$0xff] %v160
        %177 = vst [vmem:[%s134 + $0x50] sm:$0xff] %v161
        %178 = vst [vmem:[%s134 + $0x58] sm:$0xff] %v162
        %179 = vst [vmem:[%s134 + $0x60] sm:$0xff] %v163
        %180 = vst [vmem:[%s134 + $0x68] sm:$0xff] %v164
        %181 = vst [vmem:[%s134 + $0x70] sm:$0xff] %v165
        %182 = vst [vmem:[%s134 + $0x78] sm:$0xff] %v166
        %183 = vst [vmem:[%s134 + $0x80] sm:$0xff] %v151
        %184 = vst [vmem:[%s134 + $0x88] sm:$0xff] %v152
        %185 = vst [vmem:[%s134 + $0x90] sm:$0xff] %v153
        %186 = vst [vmem:[%s134 + $0x98] sm:$0xff] %v154
        %187 = vst [vmem:[%s134 + $0xa0] sm:$0xff] %v155
        %188 = vst [vmem:[%s134 + $0xa8] sm:$0xff] %v156
        %189 = vst [vmem:[%s134 + $0xb0] sm:$0xff] %v157
        %190 = vst [vmem:[%s134 + $0xb8] sm:$0xff] %v158
        %191 = vst [vmem:[%s134 + $0xc0] sm:$0xff] %v159
        %192 = vst [vmem:[%s134 + $0xc8] sm:$0xff] %v160
        %193 = vst [vmem:[%s134 + $0xd0] sm:$0xff] %v161
        %194 = vst [vmem:[%s134 + $0xd8] sm:$0xff] %v162
        %195 = vst [vmem:[%s134 + $0xe0] sm:$0xff] %v163
        %196 = vst [vmem:[%s134 + $0xe8] sm:$0xff] %v164
        %197 = vst [vmem:[%s134 + $0xf0] sm:$0xff] %v165
        %198 = vst [vmem:[%s134 + $0xf8] sm:$0xff] %v166
        %s199 = sand.u32 %s52, 1
        %s200 = scalar_lea.sflag [#allocation4], %s199
        %s201 = sand.u32 %s52, 1
        %s202 = smul.addr %s201, 256
        %s203 = scalar_lea.vmem [#allocation5], %s202
        // Predicated region
        $region29: #{tpu_custom_call.1} parent=23 // pred_check
          %p204 = pneg %p62
        $region30: #{tpu_custom_call.1} parent=23 // pred_check_branch
          %206 = sbr.rel (%p204) target = $region32
        $region31: #{tpu_custom_call.1} parent=23 // pred_region
          %208 = vsyncadd %s200, 0
          %s209 = smul.addr %s18, 32
          %s210 = smul.addr %s209, 8
          %s211 = scalar_lea.hbm %s1, %s210
          %s213 = sshll.u32 %s203, 4
          %s214 = int_to_ptr.vmem [resolvable:$true] %s213
          %s215 = sshll.u32 %s211, 4
          %s216 = int_to_ptr.hbm [resolvable:$true] %s215
          %218 = dma.vmem_to_hbm [thread:$0]  %s214, 4096, %s216, %s200
        $region32: #{tpu_custom_call.1} parent=23 // pred_fallthru
          _
      $region24: #{tpu_custom_call.1} parent=5 // pred_fallthru
        _
      %p219 = scmp.le.s32.totalorder 2, %s13
      // Predicated region
      $region33: #{tpu_custom_call.1} parent=5 // pred_check
        %p220 = pneg %p219
      $region34: #{tpu_custom_call.1} parent=5 // pred_check_branch
        %222 = sbr.rel (%p220) target = $region36
      $region35: #{tpu_custom_call.1} parent=5 // pred_region
        %s223 = ssub.s32 %s13, 2
        // Predicated region
        $region37: #{tpu_custom_call.1} parent=35 // pred_check
          %p224 = pneg %p68
        $region38: #{tpu_custom_call.1} parent=35 // pred_check_branch
          %226 = sbr.rel (%p224) target = $region40
        $region39: #{tpu_custom_call.1} parent=35 // pred_region
          %s227 = sand.u32 %s53, 1
          %s228 = scalar_lea.sflag [#allocation4], %s227
          %s229 = sand.u32 %s53, 1
          %s230 = smul.addr %s229, 256
          %s231 = scalar_lea.vmem [#allocation5], %s230
          %233 = dma.done %s228, 4096
        $region40: #{tpu_custom_call.1} parent=35 // pred_fallthru
          _
      $region36: #{tpu_custom_call.1} parent=5 // pred_fallthru
        _
    $region6: #{tpu_custom_call.1} parent=1 // loop_footer
      %s17 = sadd.s32 1, %s13
    $region7: #{tpu_custom_call.1} parent=1 // loop_footer_branch
      %12 = sbr.rel target = $region3
    $region8: #{tpu_custom_call.1} parent=1 // loop_exit
      _
    %234 = vsyncpa [#allocation3], 1
    %s235 = scalar_lea.sflag [#allocation3], 1
    %236 = vsyncpa %s235, 1
    %237 = vsyncpa [#allocation4], 1
    %s238 = scalar_lea.sflag [#allocation4], 1
    %239 = vsyncpa %s238, 1

</llo_original>
